<compile_context>
chip_gen: v7x
topology: tpu7x:2x2x1
jax: 0.10.0
libtpu: 0.0.40
codegen_flags: <defaults>
</compile_context>

<pallas_src>
import jax
import jax.numpy as jnp
from jax.experimental import pallas as pl
from jax.experimental.pallas import tpu as pltpu


def _round_down(x, m):
    return max(m, (x // m) * m)


def _sublane_multiple(dtype):
    itemsize = jnp.dtype(dtype).itemsize
    return max(8, 32 // itemsize)          # 8 for f32, 16 for bf16, 32 for int8


def _vmem_limit_bytes():
    cap = 64 << 20
    try:
        info = pltpu.get_tpu_info()
        cap = int(getattr(info, "vmem_capacity_bytes", cap))
    except Exception:
        pass
    # Leave headroom below physical capacity; v5e/v6e (128 MiB) -> 96 MiB,
    # v7x (64 MiB) -> 48 MiB.
    return int(min(max(cap - (16 << 20), 16 << 20), 96 << 20))


def _choose_tile_n(n_rows, n_classes, dtype, budget_bytes):
    """Rows per block, budgeted on the f32 in-kernel working set."""
    sub = _sublane_multiple(dtype)
    itemsize = jnp.dtype(dtype).itemsize
    per_row = (2 * n_classes * itemsize     # double-buffered logits (HBM dtype)
               + 6 * n_classes * 4          # f32 cast + elementwise temps
               + 2 * 128 * 4)               # (tile_n,1) int32 targets pad to 128 lanes
    cap = _round_down(budget_bytes // per_row, sub)
    cap = min(cap, 8192)
    if n_rows <= cap:
        return n_rows                       # single full-extent row block
    return cap


def _make_ce_kernel(tile_n, n_rows, nb_part):
    need_row_mask = (n_rows % tile_n) != 0

    def kernel(x_ref, t_ref, w_ref, num_ref, den_ref):
        i = pl.program_id(1)

        @pl.when(i == 0)
        def _init():
            num_ref[...] = jnp.zeros_like(num_ref)
            den_ref[...] = jnp.zeros_like(den_ref)

        blk = pl.program_id(0) * nb_part + i
        row0 = blk * tile_n

        @pl.when(row0 < n_rows)             # skip fully-padded / clamped blocks
        def _accumulate():
            x = x_ref[...].astype(jnp.float32)        # (tile_n, C)
            t = t_ref[...]                            # (tile_n, 1) int32
            w = w_ref[...].astype(jnp.float32)        # (1, C)

            lane = jax.lax.broadcasted_iota(jnp.int32, (1, x.shape[1]), 1)
            hit = lane == t                           # (tile_n, C), exactly one lane/row

            w_n = jnp.sum(jnp.where(hit, w, 0.0), axis=1, keepdims=True)  # target weight
            x_t = jnp.sum(jnp.where(hit, x, 0.0), axis=1, keepdims=True)  # target logit

            m = jnp.max(x, axis=1, keepdims=True)
            lse = m + jnp.log(jnp.sum(jnp.exp(x - m), axis=1, keepdims=True))

            term = w_n * (lse - x_t)                  # narrow per-row multiply

            if need_row_mask:                         # ragged edge block only
                row = row0 + jax.lax.broadcasted_iota(jnp.int32, term.shape, 0)
                valid = row < n_rows
                term = jnp.where(valid, term, 0.0)
                w_n = jnp.where(valid, w_n, 0.0)

            num_ref[...] += jnp.sum(term, keepdims=True)
            den_ref[...] += jnp.sum(w_n, keepdims=True)

    return kernel


def _weighted_ce_single_task(logits, targets, weight, *, vmem_limit, tile_budget):
    logits = jnp.asarray(logits)
    n_rows, n_classes = int(logits.shape[0]), int(logits.shape[1])
    targets = jnp.asarray(targets, jnp.int32).reshape(n_rows, 1)
    weight = jnp.asarray(weight, jnp.float32).reshape(1, n_classes)

    tile_n = _choose_tile_n(n_rows, n_classes, logits.dtype, tile_budget)
    nb = -(-n_rows // tile_n)               # total row blocks
    n_par = 2 if nb >= 2 else 1             # 2-way split -> both v7x TensorCores
    nb_part = -(-nb // n_par)
    grid = (n_par, nb_part)

    def row_block(p, i):
        # Clamp so the (possibly) extra block of the second partition repeats the
        # last valid block; Pallas elides the DMA and the body is pl.when-skipped.
        return (jnp.minimum(p * nb_part + i, nb - 1), 0)

    itemsize = jnp.dtype(logits.dtype).itemsize
    cost = pl.CostEstimate(
        flops=8 * n_rows * n_classes,
        transcendentals=n_rows * (n_classes + 1),
        bytes_accessed=n_rows * n_classes * itemsize + n_rows * 4 + n_classes * 4 + 16,
    )

    num, den = pl.pallas_call(
        _make_ce_kernel(tile_n, n_rows, nb_part),
        grid=grid,
        in_specs=[
            pl.BlockSpec((tile_n, n_classes), row_block),   # logits (full class dim)
            pl.BlockSpec((tile_n, 1), row_block),           # targets
            pl.BlockSpec((1, n_classes), lambda p, i: (0, 0)),  # class weights
        ],
        out_specs=(
            pl.BlockSpec((1, 1), lambda p, i: (p, 0)),      # num accumulator
            pl.BlockSpec((1, 1), lambda p, i: (p, 0)),      # den accumulator
        ),
        out_shape=(
            jax.ShapeDtypeStruct((n_par, 1), jnp.float32),
            jax.ShapeDtypeStruct((n_par, 1), jnp.float32),
        ),
        compiler_params=pltpu.CompilerParams(
            dimension_semantics=("parallel", "arbitrary"),
            vmem_limit_bytes=vmem_limit,
        ),
        cost_estimate=cost,
    )(logits, targets, weight)

    return jnp.sum(num) / jnp.sum(den)


def mt_cross_entropy(task_logits, task_targets, weights):
    """Multi-task weighted CE; returns a (T,) f32 vector of per-task losses."""
    assert len(task_logits) == len(task_targets) == len(weights)
    vmem_limit = _vmem_limit_bytes()
    tile_budget = max(4 << 20, vmem_limit // 2)
    losses = [
        _weighted_ce_single_task(x, y, w, vmem_limit=vmem_limit,
                                 tile_budget=tile_budget)
        for x, y, w in zip(task_logits, task_targets, weights)
    ]
    return jnp.stack(losses)


class MTLossPallas:
    """Mirrors MT_loss: one weighted CrossEntropyLoss per task, stacked."""

    def __init__(self, weights):
        self.weights = [jnp.asarray(w, dtype=jnp.float32) for w in weights]

    def __call__(self, task_logits, task_targets):
        assert len(task_logits) == len(task_targets)
        assert len(task_logits) == len(self.weights)
        return mt_cross_entropy(task_logits, task_targets, self.weights)


if __name__ == "__main__":
    key = jax.random.PRNGKey(0)
    num_classes = [4, 6, 3, 160]     # tasks with different class counts
    batches = [8, 5, 8, 300]         # and different batch sizes

    weights, logits_list, targets_list = [], [], []
    for c, n in zip(num_classes, batches):
        key, kw, kl, kt = jax.random.split(key, 4)
        weights.append(jax.random.uniform(kw, (c,), jnp.float32, 0.5, 1.5))
        logits_list.append(jax.random.normal(kl, (n, c), jnp.float32))
        targets_list.append(jax.random.randint(kt, (n,), 0, c, jnp.int32))

    mt_loss = MTLossPallas(weights)
    out = mt_loss(logits_list, targets_list)
    jax.block_until_ready(out)

    # Pure-JAX reference (same semantics as torch.nn.CrossEntropyLoss(weight)).
    def ref_ce(x, y, w):
        x = x.astype(jnp.float32)
        lse = jax.nn.logsumexp(x, axis=1)
        x_t = jnp.take_along_axis(x, y[:, None], axis=1)[:, 0]
        w_n = w[y]
        return jnp.sum(w_n * (lse - x_t)) / jnp.sum(w_n)

    ref = jnp.stack(
        [ref_ce(logits_list[i], targets_list[i], weights[i])
         for i in range(len(num_classes))]
    )
    assert jnp.allclose(out, ref, atol=1e-5, rtol=1e-5), (out, ref)
    print("KERNEL_OK")
</pallas_src>

<mosaic_0001>
module attributes {stable_mosaic.version = 11 : i64} {
  func.func @kernel(%arg0: i32, %arg1: i32, %arg2: memref<8x4xf32, #tpu.memory_space<vmem>>, %arg3: memref<8x1xi32, #tpu.memory_space<vmem>>, %arg4: memref<1x4xf32, #tpu.memory_space<vmem>>, %arg5: memref<1x1xf32, #tpu.memory_space<vmem>>, %arg6: memref<1x1xf32, #tpu.memory_space<vmem>>) attributes {dimension_semantics = [#tpu.dimension_semantics<parallel>, #tpu.dimension_semantics<arbitrary>], iteration_bounds = array<i64: 1, 1>, scalar_prefetch = 0 : i64, scratch_operands = 0 : i64, tpu.core_type = #tpu.core_type<tc>, window_params = [{transform_indices = @transform_0, window_bounds = array<i64: 8, 4>}, {transform_indices = @transform_1, window_bounds = array<i64: 8, 1>}, {pipeline_mode = #tpu.pipeline_mode<synchronous>, transform_indices = @transform_2, window_bounds = array<i64: 1, 4>}, {transform_indices = @transform_3, window_bounds = array<i64: 1, 1>}, {transform_indices = @transform_4, window_bounds = array<i64: 1, 1>}]} {
    %c0_i32 = arith.constant 0 : i32
    %0 = arith.cmpi eq, %arg1, %c0_i32 : i32
    %1 = arith.extui %0 : i1 to i32
    %c0_i32_0 = arith.constant 0 : i32
    %2 = arith.cmpi ne, %1, %c0_i32_0 : i32
    scf.if %2 {
      %cst = arith.constant 0.000000e+00 : f32
      %9 = vector.broadcast %cst : f32 to vector<1x1xf32>
      %c0 = arith.constant 0 : index
      %c0_3 = arith.constant 0 : index
      %10 = vector.load %arg5[%c0, %c0_3] : memref<1x1xf32, #tpu.memory_space<vmem>>, vector<1x1xf32>
      tpu.vector_store %arg5[%c0, %c0_3], %9 {strides = array<i32>} : memref<1x1xf32, #tpu.memory_space<vmem>>, vector<1x1xf32>,
      %cst_4 = arith.constant 0.000000e+00 : f32
      %11 = vector.broadcast %cst_4 : f32 to vector<1x1xf32>
      %c0_5 = arith.constant 0 : index
      %c0_6 = arith.constant 0 : index
      %12 = vector.load %arg6[%c0_5, %c0_6] : memref<1x1xf32, #tpu.memory_space<vmem>>, vector<1x1xf32>
      tpu.vector_store %arg6[%c0_5, %c0_6], %11 {strides = array<i32>} : memref<1x1xf32, #tpu.memory_space<vmem>>, vector<1x1xf32>,
    } else {
    }
    %c1_i32 = arith.constant 1 : i32
    %3 = arith.muli %arg0, %c1_i32 : i32
    %4 = arith.addi %3, %arg1 : i32
    %c8_i32 = arith.constant 8 : i32
    %5 = arith.muli %4, %c8_i32 : i32
    %c8_i32_1 = arith.constant 8 : i32
    %6 = arith.cmpi slt, %5, %c8_i32_1 : i32
    %7 = arith.extui %6 : i1 to i32
    %c0_i32_2 = arith.constant 0 : i32
    %8 = arith.cmpi ne, %7, %c0_i32_2 : i32
    scf.if %8 {
      %c0 = arith.constant 0 : index
      %c0_3 = arith.constant 0 : index
      %9 = vector.load %arg2[%c0, %c0_3] : memref<8x4xf32, #tpu.memory_space<vmem>>, vector<8x4xf32>
      %c0_4 = arith.constant 0 : index
      %c0_5 = arith.constant 0 : index
      %10 = vector.load %arg3[%c0_4, %c0_5] : memref<8x1xi32, #tpu.memory_space<vmem>>, vector<8x1xi32>
      %c0_6 = arith.constant 0 : index
      %c0_7 = arith.constant 0 : index
      %11 = vector.load %arg4[%c0_6, %c0_7] : memref<1x4xf32, #tpu.memory_space<vmem>>, vector<1x4xf32>
      %12 = tpu.iota {dimensions = array<i32: 1>} : vector<1x4xi32>
      %13 = vector.broadcast %12 : vector<1x4xi32> to vector<8x4xi32>
      %14 = vector.broadcast %10 : vector<8x1xi32> to vector<8x4xi32>
      %15 = arith.cmpi eq, %13, %14 : vector<8x4xi32>
      %cst = arith.constant 0.000000e+00 : f32
      %16 = vector.shape_cast %11 : vector<1x4xf32> to vector<1x4xf32>
      %17 = vector.broadcast %16 : vector<1x4xf32> to vector<8x4xf32>
      %18 = vector.broadcast %cst : f32 to vector<8x4xf32>
      %19 = arith.select %15, %17, %18 : vector<8x4xi1>, vector<8x4xf32>
      %cst_8 = arith.constant dense<0.000000e+00> : vector<8xf32>
      %20 = vector.multi_reduction <add>, %19, %cst_8 [1] : vector<8x4xf32> to vector<8xf32>
      %21 = vector.shape_cast %20 : vector<8xf32> to vector<8x1xf32>
      %cst_9 = arith.constant 0.000000e+00 : f32
      %22 = vector.broadcast %cst_9 : f32 to vector<8x4xf32>
      %23 = arith.select %15, %9, %22 : vector<8x4xi1>, vector<8x4xf32>
      %cst_10 = arith.constant dense<0.000000e+00> : vector<8xf32>
      %24 = vector.multi_reduction <add>, %23, %cst_10 [1] : vector<8x4xf32> to vector<8xf32>
      %25 = vector.shape_cast %24 : vector<8xf32> to vector<8x1xf32>
      %cst_11 = arith.constant dense<0xFF800000> : vector<8xf32>
      %26 = vector.multi_reduction <maximumf>, %9, %cst_11 [1] : vector<8x4xf32> to vector<8xf32>
      %27 = vector.shape_cast %26 : vector<8xf32> to vector<8x1xf32>
      %28 = vector.broadcast %27 : vector<8x1xf32> to vector<8x4xf32>
      %29 = arith.subf %9, %28 : vector<8x4xf32>
      %30 = math.exp %29 : vector<8x4xf32>
      %cst_12 = arith.constant dense<0.000000e+00> : vector<8xf32>
      %31 = vector.multi_reduction <add>, %30, %cst_12 [1] : vector<8x4xf32> to vector<8xf32>
      %32 = vector.shape_cast %31 : vector<8xf32> to vector<8x1xf32>
      %33 = math.log %32 : vector<8x1xf32>
      %34 = arith.addf %27, %33 : vector<8x1xf32>
      %35 = arith.subf %34, %25 : vector<8x1xf32>
      %36 = arith.mulf %21, %35 : vector<8x1xf32>
      %c0_13 = arith.constant 0 : index
      %c0_14 = arith.constant 0 : index
      %37 = vector.load %arg5[%c0_13, %c0_14] : memref<1x1xf32, #tpu.memory_space<vmem>>, vector<1x1xf32>
      %38 = vector.shape_cast %36 : vector<8x1xf32> to vector<1x8x1xf32>
      %cst_15 = arith.constant dense<0.000000e+00> : vector<1xf32>
      %39 = vector.multi_reduction <add>, %38, %cst_15 [1, 2] : vector<1x8x1xf32> to vector<1xf32>
      %40 = vector.shape_cast %39 : vector<1xf32> to vector<1x1x1xf32>
      %41 = vector.extract %40[0, 0, 0] : f32 from vector<1x1x1xf32>
      %42 = vector.broadcast %41 : f32 to vector<1x1xf32>
      %43 = arith.addf %37, %42 : vector<1x1xf32>
      %c0_16 = arith.constant 0 : index
      %c0_17 = arith.constant 0 : index
      %44 = vector.load %arg5[%c0_16, %c0_17] : memref<1x1xf32, #tpu.memory_space<vmem>>, vector<1x1xf32>
      tpu.vector_store %arg5[%c0_16, %c0_17], %43 {strides = array<i32>} : memref<1x1xf32, #tpu.memory_space<vmem>>, vector<1x1xf32>,
      %c0_18 = arith.constant 0 : index
      %c0_19 = arith.constant 0 : index
      %45 = vector.load %arg6[%c0_18, %c0_19] : memref<1x1xf32, #tpu.memory_space<vmem>>, vector<1x1xf32>
      %46 = vector.shape_cast %21 : vector<8x1xf32> to vector<1x8x1xf32>
      %cst_20 = arith.constant dense<0.000000e+00> : vector<1xf32>
      %47 = vector.multi_reduction <add>, %46, %cst_20 [1, 2] : vector<1x8x1xf32> to vector<1xf32>
      %48 = vector.shape_cast %47 : vector<1xf32> to vector<1x1x1xf32>
      %49 = vector.extract %48[0, 0, 0] : f32 from vector<1x1x1xf32>
      %50 = vector.broadcast %49 : f32 to vector<1x1xf32>
      %51 = arith.addf %45, %50 : vector<1x1xf32>
      %c0_21 = arith.constant 0 : index
      %c0_22 = arith.constant 0 : index
      %52 = vector.load %arg6[%c0_21, %c0_22] : memref<1x1xf32, #tpu.memory_space<vmem>>, vector<1x1xf32>
      tpu.vector_store %arg6[%c0_21, %c0_22], %51 {strides = array<i32>} : memref<1x1xf32, #tpu.memory_space<vmem>>, vector<1x1xf32>,
    } else {
    }
    return
  }
  func.func @transform_0(%arg0: i32, %arg1: i32) -> (i32, i32) {
    %c1_i32 = arith.constant 1 : i32
    %0 = arith.muli %arg0, %c1_i32 : i32
    %1 = arith.addi %0, %arg1 : i32
    %c0_i32 = arith.constant 0 : i32
    %2 = arith.minsi %1, %c0_i32 : i32
    %c0_i32_0 = arith.constant 0 : i32
    %c0_i32_1 = arith.constant 0 : i32
    return %2, %c0_i32_0 : i32, i32
  }
  func.func @transform_1(%arg0: i32, %arg1: i32) -> (i32, i32) {
    %c1_i32 = arith.constant 1 : i32
    %0 = arith.muli %arg0, %c1_i32 : i32
    %1 = arith.addi %0, %arg1 : i32
    %c0_i32 = arith.constant 0 : i32
    %2 = arith.minsi %1, %c0_i32 : i32
    %c0_i32_0 = arith.constant 0 : i32
    %c0_i32_1 = arith.constant 0 : i32
    return %2, %c0_i32_0 : i32, i32
  }
  func.func @transform_2(%arg0: i32, %arg1: i32) -> (i32, i32) {
    %c0_i32 = arith.constant 0 : i32
    %c0_i32_0 = arith.constant 0 : i32
    %c0_i32_1 = arith.constant 0 : i32
    return %c0_i32, %c0_i32_0 : i32, i32
  }
  func.func @transform_3(%arg0: i32, %arg1: i32) -> (i32, i32) {
    %c0_i32 = arith.constant 0 : i32
    %c0_i32_0 = arith.constant 0 : i32
    return %arg0, %c0_i32 : i32, i32
  }
  func.func @transform_4(%arg0: i32, %arg1: i32) -> (i32, i32) {
    %c0_i32 = arith.constant 0 : i32
    %c0_i32_0 = arith.constant 0 : i32
    return %arg0, %c0_i32 : i32, i32
  }
}

</mosaic_0001>

<llo_original>
// kernel: tpu_custom_call.1
$region0: #{tpu_custom_call.1}
  #allocation0 [shape = 'u32[]', space=smem, size = 0x4, offset = 0x4, fixed_abs, tag = 'smem constant byte address 0x4 - core index']
  #allocation1 [shape = 'u32[144,128]{1,0:T(1,128)}', space=vmem, size = 0x12000, scoped, tag = 'internal scratch']
  %s0 = inlined_call_operand.vmem [shape: f32[8,4], index: 0, kind: input, shape index: {}]
  %s1 = inlined_call_operand.vmem [shape: s32[8,1], index: 1, kind: input, shape index: {}]
  %s2 = inlined_call_operand.vmem [shape: f32[1,4], index: 2, kind: input, shape index: {}]
  %s3 = inlined_call_operand.hbm [shape: f32[1,1], index: 3, kind: output, shape index: {0}]
  %s4 = inlined_call_operand.hbm [shape: f32[1,1], index: 4, kind: output, shape index: {1}]
  %5 = xla_tuple %s3, %s4
  %s6 = sld [smem:[#allocation0]]
  $region38: #{tpu_custom_call.1} parent=0
    _
  %s8 = ssub.s32 1, %s6
  %s9 = scalar_select 0, %s8, %s6
  $region1: #{tpu_custom_call.1} parent=0
    #allocation2 [shape = 'u8[512]{0}', space=vmem, size = 0x400, scoped, tag = 'output window, operand 0, single buffered']
    #allocation3 [shape = 's32[1]{0}', space=sflag, size = 0x4, scoped, tag = 'scoped memory for tpu_custom_call.1']
    #allocation4 [shape = 'u8[512]{0}', space=vmem, size = 0x400, scoped, tag = 'output window, operand 1, single buffered']
    #allocation5 [shape = 's32[1]{0}', space=sflag, size = 0x4, scoped, tag = 'scoped memory for tpu_custom_call.1']
    %10 = vsyncpa [#allocation3], 0
    %11 = vsyncpa [#allocation5], 0
    // Predicated region
    $region2: #{tpu_custom_call.1} parent=1 // pred_check
      _
    $region3: #{tpu_custom_call.1} parent=1 // pred_check_branch
      %13 = sbr.rel (0) target = $region5
    $region4: #{tpu_custom_call.1} parent=1 // pred_region
      %s14 = sadd.s32 0, 0
      %p15 = scmp.lt.s32.totalorder %s14, 0
      %s16 = scalar_select %p15, %s14, 0
      %p17 = scmp.lt.s32.totalorder %s16, 0
      %s18 = scalar_select %p17, %s16, 0
      %s19 = smul.addr %s18, 8
      %s20 = scalar_lea.vmem %s0, %s19
      %s21 = sadd.s32 0, 0
      %p22 = scmp.lt.s32.totalorder %s21, 0
      %s23 = scalar_select %p22, %s21, 0
    $region5: #{tpu_custom_call.1} parent=1 // pred_fallthru
      _
    // Predicated region
    $region6: #{tpu_custom_call.1} parent=1 // pred_check
      _
    $region7: #{tpu_custom_call.1} parent=1 // pred_check_branch
      %25 = sbr.rel (0) target = $region9
    $region8: #{tpu_custom_call.1} parent=1 // pred_region
      %s26 = sadd.s32 0, 0
      %p27 = scmp.lt.s32.totalorder %s26, 0
      %s28 = scalar_select %p27, %s26, 0
      %p29 = scmp.lt.s32.totalorder %s28, 0
      %s30 = scalar_select %p29, %s28, 0
      %s31 = smul.addr %s30, 8
      %s32 = scalar_lea.vmem %s1, %s31
      %s33 = sadd.s32 0, 0
      %p34 = scmp.lt.s32.totalorder %s33, 0
      %s35 = scalar_select %p34, %s33, 0
    $region9: #{tpu_custom_call.1} parent=1 // pred_fallthru
      _
    // Predicated region
    $region10: #{tpu_custom_call.1} parent=1 // pred_check
      _
    $region11: #{tpu_custom_call.1} parent=1 // pred_check_branch
      %37 = sbr.rel (0) target = $region13
    $region12: #{tpu_custom_call.1} parent=1 // pred_region
      _
    $region13: #{tpu_custom_call.1} parent=1 // pred_fallthru
      _
    %s38 = sadd.s32 0, 0
    %p39 = scmp.lt.s32.totalorder %s38, 0
    %s40 = scalar_select %p39, %s38, 0
    %p41 = scmp.lt.s32.totalorder %s40, 0
    %s42 = scalar_select %p41, %s40, 0
    %s43 = smul.addr %s42, 8
    %s44 = scalar_lea.vmem %s0, %s43
    %s45 = sadd.s32 0, 0
    %p46 = scmp.lt.s32.totalorder %s45, 0
    %s47 = scalar_select %p46, %s45, 0
    %p48 = scmp.lt.s32.totalorder %s47, 0
    %s49 = scalar_select %p48, %s47, 0
    %s50 = smul.addr %s49, 8
    %s51 = scalar_lea.vmem %s1, %s50
    %s52 = sadd.s32 0, 0
    %p53 = scmp.lt.s32.totalorder %s52, 0
    %s54 = scalar_select %p53, %s52, 0
    %p55 = scmp.lt.s32.totalorder %s54, 0
    %s56 = scalar_select %p55, %s54, 0
    %s57 = smul.addr %s56, 8
    %s58 = scalar_lea.vmem %s0, %s57
    %s59 = sadd.s32 0, 0
    %p60 = scmp.lt.s32.totalorder %s59, 0
    %s61 = scalar_select %p60, %s59, 0
    %s62 = sadd.s32 0, 0
    %p63 = scmp.lt.s32.totalorder %s62, 0
    %s64 = scalar_select %p63, %s62, 0
    %p65 = scmp.lt.s32.totalorder %s64, 0
    %s66 = scalar_select %p65, %s64, 0
    %s67 = smul.addr %s66, 8
    %s68 = scalar_lea.vmem %s1, %s67
    %s69 = sadd.s32 0, 0
    %p70 = scmp.lt.s32.totalorder %s69, 0
    %s71 = scalar_select %p70, %s69, 0
    %p72 = scmp.eq.s32.totalorder 0, 0
    // Predicated region
    $region14: #{tpu_custom_call.1} parent=1 // pred_check
      %p73 = pneg %p72
    $region15: #{tpu_custom_call.1} parent=1 // pred_check_branch
      %75 = sbr.rel (%p73) target = $region17
    $region16: #{tpu_custom_call.1} parent=1 // pred_region
      %vm76 = vcmask 0
      %77 = vst.msk [vmem:[#allocation2] sm:$0x1] %vm76, 0.0
      %78 = vst.msk [vmem:[#allocation4] sm:$0x1] %vm76, 0.0
    $region17: #{tpu_custom_call.1} parent=1 // pred_fallthru
      _
    %s79 = sadd.s32 0, 0
    %s80 = smul.u32 %s79, 8
    %p81 = scmp.lt.s32.totalorder %s80, 8
    // Predicated region
    $region18: #{tpu_custom_call.1} parent=1 // pred_check
      %p82 = pneg %p81
    $region19: #{tpu_custom_call.1} parent=1 // pred_check_branch
      %84 = sbr.rel (%p82) target = $region21
    $region20: #{tpu_custom_call.1} parent=1 // pred_region
      %v85 = vld [vmem:[%s58] sm:$0xff]
      %v86 = vld [vmem:[%s68] sm:$0xff]
      %v87 = vld [vmem:[%s2] sm:$0x1]
      %v88 = vlaneseq
      %v89 = vand.u32 %v88, 127
      %90 = vset.pattern.permute.xlu0 0
      %91 = vperm.xlu0 %90, %v86
      %v92 = vpop.permute.xlu0 %91
      %vm93 = vcmp.eq.s32.totalorder %v89, %v92
      %v95 = vlaneseq
      %v96 = vshrl.u32 %v95, 7
      %v97 = vsub.s32 0, %v96
      %v98 = vrot.slane %v87, %v97
      %v100 = vsel %vm93, %v98, 0.0
      %vm101 = vcmask 31744
      %v102 = vsel %vm101, %v100, 0.0
      %103 = vadd.xlane.f32.xlu0 %v102
      %v104 = vpop.xlane.xlu0 %103
      %v105 = vsel %vm93, %v85, 0.0
      %v106 = vsel %vm101, %v105, 0.0
      %107 = vadd.xlane.f32.xlu0 %v106
      %v108 = vpop.xlane.xlu0 %107
      %v109 = vsel %vm101, %v85, -inf
      %110 = vmax.xlane.f32.xlu0 %v109
      %v111 = vpop.xlane.xlu0 %110
      %v112 = vsub.f32 %v85, %v111
      %v113 = vmul.f32 %v112, 1.442695
      %v114 = vpow.pop %v113
      %v115 = vsel %vm101, %v114, 0.0
      %116 = vadd.xlane.f32.xlu0 %v115
      %v117 = vpop.xlane.xlu0 %116
      %v118 = vlog2.pop %v117
      %v119 = vmul.f32 %v118, 0.6931472
      %v120 = vadd.f32 %v111, %v119
      %v121 = vsub.f32 %v120, %v108
      %v122 = vmul.f32 %v104, %v121
      %v123 = vld [vmem:[#allocation2] sm:$0x1]
      %vm124 = vcmask 7168
      %v125 = vsel %vm124, %v122, 0.0
      %126 = vadd.xlane.f32.xlu0 %v125
      %v127 = vpop.xlane.xlu0 %126
      %v128 = vrot.slane %v127, 4
      %v129 = vadd.f32 %v127, %v128
      %v130 = vrot.slane %v129, 2
      %v131 = vadd.f32 %v129, %v130
      %v132 = vrot.slane %v131, 1
      %v133 = vadd.f32 %v131, %v132
      %s134 = vtos %v133
      %v135 = vstv %s134
      %v136 = vadd.f32 %v123, %v135
      %vm137 = vcmask 0
      %138 = vst.msk [vmem:[#allocation2] sm:$0x1] %vm137, %v136
      %v139 = vld [vmem:[#allocation4] sm:$0x1]
      %v140 = vsel %vm124, %v104, 0.0
      %141 = vadd.xlane.f32.xlu0 %v140
      %v142 = vpop.xlane.xlu0 %141
      %v143 = vrot.slane %v142, 4
      %v144 = vadd.f32 %v142, %v143
      %v145 = vrot.slane %v144, 2
      %v146 = vadd.f32 %v144, %v145
      %v147 = vrot.slane %v146, 1
      %v148 = vadd.f32 %v146, %v147
      %s149 = vtos %v148
      %v150 = vstv %s149
      %v151 = vadd.f32 %v139, %v150
      %152 = vst.msk [vmem:[#allocation4] sm:$0x1] %vm137, %v151
    $region21: #{tpu_custom_call.1} parent=1 // pred_fallthru
      _
    // Predicated region
    $region22: #{tpu_custom_call.1} parent=1 // pred_check
      _
    $region23: #{tpu_custom_call.1} parent=1 // pred_check_branch
      %154 = sbr.rel (0) target = $region25
    $region24: #{tpu_custom_call.1} parent=1 // pred_region
      %s156 = ssub.s32 16, 16
      %157 = vsyncadd [#allocation3], %s156
      %s159 = sshll.u32 [#allocation2], 4
      %s160 = int_to_ptr.vmem [resolvable:$true] %s159
      %162 = dma.vmem_to_hbm [thread:$0]  %s160, 16, %s3, [#allocation3]
    $region25: #{tpu_custom_call.1} parent=1 // pred_fallthru
      _
    // Predicated region
    $region26: #{tpu_custom_call.1} parent=1 // pred_check
      _
    $region27: #{tpu_custom_call.1} parent=1 // pred_check_branch
      %164 = sbr.rel (0) target = $region29
    $region28: #{tpu_custom_call.1} parent=1 // pred_region
      %s166 = ssub.s32 16, 16
      %167 = vsyncadd [#allocation5], %s166
      %s169 = sshll.u32 [#allocation4], 4
      %s170 = int_to_ptr.vmem [resolvable:$true] %s169
      %172 = dma.vmem_to_hbm [thread:$0]  %s170, 16, %s4, [#allocation5]
    $region29: #{tpu_custom_call.1} parent=1 // pred_fallthru
      _
    // Predicated region
    $region30: #{tpu_custom_call.1} parent=1 // pred_check
      _
    $region31: #{tpu_custom_call.1} parent=1 // pred_check_branch
      %174 = sbr.rel (0) target = $region33
    $region32: #{tpu_custom_call.1} parent=1 // pred_region
      %175 = dma.done [#allocation3], 16
    $region33: #{tpu_custom_call.1} parent=1 // pred_fallthru
      _
    // Predicated region
    $region34: #{tpu_custom_call.1} parent=1 // pred_check
      _
    $region35: #{tpu_custom_call.1} parent=1 // pred_check_branch
      %177 = sbr.rel (0) target = $region37
    $region36: #{tpu_custom_call.1} parent=1 // pred_region
      %178 = dma.done [#allocation5], 16
    $region37: #{tpu_custom_call.1} parent=1 // pred_fallthru
      _
    %179 = vsyncpa [#allocation3], 1
    %180 = vsyncpa [#allocation5], 1

</llo_original>
